<compile_context>
chip_gen: v5e
topology: v5e:2x2
jax: 0.10.0
libtpu: 0.0.40
codegen_flags: <defaults>
</compile_context>

<pallas_src>
import jax
import jax.numpy as jnp
from jax.experimental import pallas as pl
from jax.experimental.pallas import tpu as pltpu

_LANES = 1024                   # lane-dense last dim (multiple of 128)
_TARGET_BLOCK_BYTES = 4 << 20   # ~4 MiB per block (roofline plateau)


def _elementwise_kernel(x_ref, o_ref):
    # Exact PyTorch op order: add 1, sub 2, mul 3, div 4 (div-by-4 is exact).
    x = x_ref[...]
    o_ref[...] = (((x + 1.0) - 2.0) * 3.0 / 4.0).astype(o_ref.dtype)


def _round_up(a, b):
    return (a + b - 1) // b * b


def pt_module_forward(x, *, donate_input=False):
    """((x + 1) - 2) * 3 / 4 elementwise via a Pallas TPU kernel.

    Assumes a floating dtype (as the PyTorch module implies).  Set
    donate_input=True only if the caller does not reuse `x` afterwards.
    """
    orig_shape = x.shape
    dtype = x.dtype
    flat = x.reshape(-1)
    n = int(flat.shape[0])
    itemsize = jnp.dtype(dtype).itemsize

    cost = pl.CostEstimate(flops=3 * n, transcendentals=0,
                           bytes_accessed=2 * n * itemsize)
    cparams = pltpu.CompilerParams(
        dimension_semantics=("parallel",),   # megacore sharding on v7x
        vmem_limit_bytes=32 << 20,           # headroom for 2x(in+out) 4 MiB blocks
    )
    io_aliases = {0: 0} if donate_input else {}

    if n % _LANES == 0:
        # Primary path: lane-dense (rows, 1024) 2-D view, no padding needed.
        rows = n // _LANES
        x2d = flat.reshape(rows, _LANES)

        row_align = 8 * max(1, 4 // itemsize)        # sublane pack: 8/16/32 rows
        max_block_rows = max(row_align,
                             _TARGET_BLOCK_BYTES // (_LANES * itemsize))
        if rows <= row_align:
            # Tiny tensor: one full-extent block (always a legal block shape).
            block_rows = rows
        else:
            # At least 2 blocks (both v7x TensorCores busy), capped at ~4 MiB.
            block_rows = min(max_block_rows,
                             _round_up(pl.cdiv(rows, 2), row_align))
        grid = (pl.cdiv(rows, block_rows),)          # partial tail block OK

        out = pl.pallas_call(
            _elementwise_kernel,
            out_shape=jax.ShapeDtypeStruct((rows, _LANES), dtype),
            grid=grid,
            in_specs=[pl.BlockSpec((block_rows, _LANES), lambda i: (i, 0))],
            out_specs=pl.BlockSpec((block_rows, _LANES), lambda i: (i, 0)),
            compiler_params=cparams,
            cost_estimate=cost,
            input_output_aliases=io_aliases,
        )(x2d)
        return out.reshape(orig_shape)

    # Fallback: numel not a multiple of 1024.  Tile the flat 1-D array
    # directly with a 128-multiple block; Pallas pads reads / drops OOB
    # writes on the tail block, so still no pad/slice HBM passes.
    vreg_elems = _LANES * max(1, 4 // itemsize)      # one packed vreg worth
    max_block = max(vreg_elems,
                    (_TARGET_BLOCK_BYTES // itemsize) // vreg_elems * vreg_elems)
    if n <= vreg_elems:
        block = n                                    # full extent: legal
    else:
        block = min(max_block, _round_up(pl.cdiv(n, 2), vreg_elems))
    grid = (pl.cdiv(n, block),)

    out = pl.pallas_call(
        _elementwise_kernel,
        out_shape=jax.ShapeDtypeStruct((n,), dtype),
        grid=grid,
        in_specs=[pl.BlockSpec((block,), lambda i: (i,))],
        out_specs=pl.BlockSpec((block,), lambda i: (i,)),
        compiler_params=cparams,
        cost_estimate=cost,
        input_output_aliases=io_aliases,
    )(flat)
    return out.reshape(orig_shape)


if __name__ == "__main__":
    key = jax.random.PRNGKey(0)
    x = jax.random.normal(key, (2, 4, 16, 16), dtype=jnp.float32)

    out = pt_module_forward(x)
    out = jax.block_until_ready(out)

    # Reference: plain JAX semantics of the PyTorch module (same op order).
    ref = ((x + 1.0) - 2.0) * 3.0 / 4.0
    assert out.shape == ref.shape and out.dtype == ref.dtype
    assert jnp.allclose(out, ref, atol=1e-6, rtol=1e-6)

    print("KERNEL_OK")
</pallas_src>

<mosaic_0001>
module attributes {stable_mosaic.version = 11 : i64} {
  func.func @_elementwise_kernel(%arg0: i32, %arg1: memref<2x1024xf32, #tpu.memory_space<vmem>>, %arg2: memref<2x1024xf32, #tpu.memory_space<vmem>>) attributes {dimension_semantics = [#tpu.dimension_semantics<parallel>], iteration_bounds = array<i64: 1>, scalar_prefetch = 0 : i64, scratch_operands = 0 : i64, tpu.core_type = #tpu.core_type<tc>, window_params = [{transform_indices = @transform_0, window_bounds = array<i64: 2, 1024>}, {transform_indices = @transform_1, window_bounds = array<i64: 2, 1024>}]} {
    %c0 = arith.constant 0 : index
    %c0_0 = arith.constant 0 : index
    %0 = vector.load %arg1[%c0, %c0_0] : memref<2x1024xf32, #tpu.memory_space<vmem>>, vector<2x1024xf32>
    %cst = arith.constant 1.000000e+00 : f32
    %1 = vector.broadcast %cst : f32 to vector<2x1024xf32>
    %2 = arith.addf %0, %1 : vector<2x1024xf32>
    %cst_1 = arith.constant 2.000000e+00 : f32
    %3 = vector.broadcast %cst_1 : f32 to vector<2x1024xf32>
    %4 = arith.subf %2, %3 : vector<2x1024xf32>
    %cst_2 = arith.constant 3.000000e+00 : f32
    %5 = vector.broadcast %cst_2 : f32 to vector<2x1024xf32>
    %6 = arith.mulf %4, %5 : vector<2x1024xf32>
    %cst_3 = arith.constant 4.000000e+00 : f32
    %7 = vector.broadcast %cst_3 : f32 to vector<2x1024xf32>
    %8 = arith.divf %6, %7 : vector<2x1024xf32>
    %c0_4 = arith.constant 0 : index
    %c0_5 = arith.constant 0 : index
    %9 = vector.load %arg2[%c0_4, %c0_5] : memref<2x1024xf32, #tpu.memory_space<vmem>>, vector<2x1024xf32>
    tpu.vector_store %arg2[%c0_4, %c0_5], %8 {strides = array<i32>} : memref<2x1024xf32, #tpu.memory_space<vmem>>, vector<2x1024xf32>,
    return
  }
  func.func @transform_0(%arg0: i32) -> (i32, i32) {
    %c0_i32 = arith.constant 0 : i32
    %c0_i32_0 = arith.constant 0 : i32
    return %arg0, %c0_i32 : i32, i32
  }
  func.func @transform_1(%arg0: i32) -> (i32, i32) {
    %c0_i32 = arith.constant 0 : i32
    %c0_i32_0 = arith.constant 0 : i32
    return %arg0, %c0_i32 : i32, i32
  }
}

</mosaic_0001>

<llo_original>
// kernel: tpu_custom_call.1
$region0: #{tpu_custom_call.1}
  #allocation0 [shape = 'u32[]', space=smem, size = 0x4, offset = 0x4, fixed_abs, tag = 'smem constant byte address 0x4 - core index']
  #allocation1 [shape = 'u32[72,128]{1,0:T(1,128)}', space=vmem, size = 0x9000, scoped, tag = 'internal scratch']
  %s0 = inlined_call_operand.hbm [shape: f32[2,1024], index: 0, kind: input, shape index: {}]
  %s1 = inlined_call_operand.hbm [shape: f32[2,1024], index: 1, kind: output, shape index: {}]
  %s2 = sld [smem:[#allocation0]]
  $region18: #{tpu_custom_call.1} parent=0
    _
  %s4 = ssub.s32 1, %s2
  %s5 = scalar_select 0, %s4, %s2
  $region1: #{tpu_custom_call.1} parent=0
    #allocation2 [shape = 'u8[8192]{0}', space=vmem, size = 0x2000, scoped, tag = 'input window, operand 0, single buffered']
    #allocation3 [shape = 's32[1]{0}', space=sflag, size = 0x4, scoped, tag = 'scoped memory for tpu_custom_call.1']
    #allocation4 [shape = 's32[1]{0}', space=sflag, size = 0x4, scoped, tag = 'scoped memory for tpu_custom_call.1']
    #allocation5 [shape = 'u8[8192]{0}', space=vmem, size = 0x2000, scoped, tag = 'output window, operand 0, single buffered']
    %6 = vsyncpa [#allocation3], 0
    %7 = vsyncpa [#allocation4], 0
    // Predicated region
    $region2: #{tpu_custom_call.1} parent=1 // pred_check
      _
    $region3: #{tpu_custom_call.1} parent=1 // pred_check_branch
      %9 = sbr.rel (0) target = $region5
    $region4: #{tpu_custom_call.1} parent=1 // pred_region
      %11 = vsyncadd [#allocation3], 0
      %s13 = sshll.u32 %s0, 4
      %s14 = int_to_ptr.hbm [resolvable:$true] %s13
      %s15 = sshll.u32 [#allocation2], 4
      %s16 = int_to_ptr.vmem [resolvable:$true] %s15
      %18 = dma.hbm_to_vmem [thread:$0]  %s14, 256, %s16, [#allocation3]
    $region5: #{tpu_custom_call.1} parent=1 // pred_fallthru
      _
    // Predicated region
    $region6: #{tpu_custom_call.1} parent=1 // pred_check
      _
    $region7: #{tpu_custom_call.1} parent=1 // pred_check_branch
      %20 = sbr.rel (0) target = $region9
    $region8: #{tpu_custom_call.1} parent=1 // pred_region
      %22 = dma.done [#allocation3], 256
    $region9: #{tpu_custom_call.1} parent=1 // pred_fallthru
      _
    %v23 = vld [vmem:[#allocation2] sm:$0xff]
    %v24 = vld [vmem:[#allocation2 + $0x8] sm:$0xff]
    %v25 = vadd.f32 %v23, 1.0
    %v26 = vadd.f32 %v24, 1.0
    %v27 = vsub.f32 %v25, 2.0
    %v28 = vsub.f32 %v26, 2.0
    %v29 = vmul.f32 %v27, 3.0
    %v30 = vmul.f32 %v28, 3.0
    %v31 = vrcp.pop 4.0
    %v32 = vmul.f32 4.0, %v31
    %v33 = vsub.f32 1.0, %v32
    %v34 = vmul.f32 %v31, %v33
    %v35 = vadd.f32 %v31, %v34
    %vm36 = vweird.f32 %v31
    %v37 = vsel %vm36, %v31, %v35
    %v38 = vmul.f32 %v29, %v37
    %v39 = vmul.f32 %v30, %v37
    %40 = vst [vmem:[#allocation5] sm:$0xff] %v38
    %41 = vst [vmem:[#allocation5 + $0x8] sm:$0xff] %v39
    // Predicated region
    $region10: #{tpu_custom_call.1} parent=1 // pred_check
      _
    $region11: #{tpu_custom_call.1} parent=1 // pred_check_branch
      %43 = sbr.rel (0) target = $region13
    $region12: #{tpu_custom_call.1} parent=1 // pred_region
      %45 = vsyncadd [#allocation4], 0
      %s47 = sshll.u32 [#allocation5], 4
      %s48 = int_to_ptr.vmem [resolvable:$true] %s47
      %s49 = sshll.u32 %s1, 4
      %s50 = int_to_ptr.hbm [resolvable:$true] %s49
      %52 = dma.vmem_to_hbm [thread:$0]  %s48, 256, %s50, [#allocation4]
    $region13: #{tpu_custom_call.1} parent=1 // pred_fallthru
      _
    // Predicated region
    $region14: #{tpu_custom_call.1} parent=1 // pred_check
      _
    $region15: #{tpu_custom_call.1} parent=1 // pred_check_branch
      %54 = sbr.rel (0) target = $region17
    $region16: #{tpu_custom_call.1} parent=1 // pred_region
      %56 = dma.done [#allocation4], 256
    $region17: #{tpu_custom_call.1} parent=1 // pred_fallthru
      _
    %57 = vsyncpa [#allocation3], 1
    %58 = vsyncpa [#allocation4], 1

</llo_original>
